<compile_context>
chip_gen: v5e
topology: v5e:2x2
jax: 0.10.0
libtpu: 0.0.40
codegen_flags: <defaults>
</compile_context>

<pallas_src>
import math

import jax
import jax.numpy as jnp
from jax import lax
from jax.experimental import pallas as pl
from jax.experimental.pallas import tpu as pltpu


def _node_network_kernel(x_ref, r_ref, adj_ref, w1_ref, w2_ref, b_ref, o_ref):
    # x_ref  : (G, N, F1)     raw node features for G graphs
    # r_ref  : (G, N, F2)     node_3D_repr for G graphs
    # adj_ref: (G, N, N)      adjacencies (possibly narrow dtype)
    # w1_ref : (F1, Fout)     top rows of the weight (for x)
    # w2_ref : (F2, Fout)     bottom rows of the weight (for node_3D_repr)
    # b_ref  : (1, Fout)      bias (f32)
    # o_ref  : (G, N, Fout)
    G, N, F1 = x_ref.shape
    F2 = r_ref.shape[-1]
    Fout = o_ref.shape[-1]

    # ---- feature transform: one big MXU matmul over all G*N rows ----------
    # concat(x, r) @ [W1; W2] == x @ W1 + r @ W2   (concat fused away)
    # Operands stay in their native dtype; MXU accumulates in f32.
    x2 = x_ref[...].reshape(G * N, F1)
    r2 = r_ref[...].reshape(G * N, F2)
    xw = jnp.dot(x2, w1_ref[...], preferred_element_type=jnp.float32)
    xw = xw + jnp.dot(r2, w2_ref[...], preferred_element_type=jnp.float32)
    xw = xw.reshape(G, N, Fout)

    # ---- self loops handled algebraically (no patched-adjacency temp) ------
    adjf = adj_ref[...].astype(jnp.float32)
    row = lax.broadcasted_iota(jnp.int32, (N, N), 0)
    col = lax.broadcasted_iota(jnp.int32, (N, N), 1)
    eye = (row == col).astype(jnp.float32)[None]                  # (1, N, N)
    adj_diag = jnp.sum(adjf * eye, axis=-1, keepdims=True)        # (G, N, 1)
    self_corr = jnp.float32(1.0) - adj_diag                       # A'[i,i]-A[i,i]

    # rowsum(A') = rowsum(A) + (1 - diag(A))
    deg = jnp.sum(adjf, axis=-1, keepdims=True) + self_corr       # (G, N, 1)
    dis = lax.rsqrt(jnp.maximum(deg, jnp.float32(1.0)))           # deg^-0.5

    # D^-1/2 A' D^-1/2 @ XW  ==  dis * (A @ (dis*XW) + (1-diag)*(dis*XW))
    y = dis * xw                                                  # (G, N, Fout)
    agg = jnp.einsum('gnm,gmf->gnf', adjf, y,
                     preferred_element_type=jnp.float32)
    agg = agg + self_corr * y
    out = dis * agg + b_ref[...][None]                            # (1,1,Fout)
    o_ref[...] = out.astype(o_ref.dtype)


def _vmem_budget_and_limit():
    """Generation-aware VMEM budget (bytes) + explicit scoped-VMEM limit."""
    cap = None
    try:
        info = pltpu.get_tpu_info()
        cap = getattr(info, "vmem_capacity_bytes", None)
    except Exception:
        cap = None
    if not isinstance(cap, int) or cap <= 0:
        cap = 64 << 20  # conservative fallback: v7x-sized per-TC VMEM
    budget = int(cap * 0.55)                     # tiles + kernel temps
    limit = max(budget, min(int(cap * 0.80), cap - (8 << 20)))
    return budget, int(limit)


def _choose_group(B, N, F1, F2, Fout, x_bytes, adj_bytes, out_bytes,
                  vmem_budget):
    """Pick G graphs per grid step: fill the MXU / HBM pipe, stay under VMEM,
    keep >= 2 grid steps so v7x's two TensorCores both get work."""
    # double-buffered input/output tiles per graph
    io = 2 * (N * (F1 + F2) * x_bytes
              + N * N * adj_bytes
              + N * Fout * out_bytes)
    # in-kernel f32 temporaries per graph: adjf copy + xw/y/agg/out
    tmp = 4 * (N * N + 4 * N * Fout)
    per_graph = max(io + tmp, 1)
    max_g = max(1, vmem_budget // per_graph)
    g = min(B, max_g)
    if B >= 2:
        g = min(g, pl.cdiv(B, 2))        # guarantee grid >= 2 (v7x megacore)
    g = max(g, 1)
    while B % g != 0:                    # G must divide B
        g -= 1
    return g


def node_network_dense_03(x, adj, node_3D_repr, weight, bias, *,
                          adj_dtype=None):
    """x: (B,N,F1), adj: (B,N,N), node_3D_repr: (B,N,F2),
       weight: (F1+F2, Fout), bias: (Fout,) -> (B, N, Fout)

    adj_dtype: optional narrower dtype (e.g. jnp.bfloat16) for the adjacency
    HBM stream.  Only exact for exactly-representable (e.g. 0/1) adjacencies;
    leave None for weighted adjacencies.
    """
    if x.ndim == 2:
        x = x[None]
    if adj.ndim == 2:
        adj = adj[None]
    if node_3D_repr.ndim == 2:
        node_3D_repr = node_3D_repr[None]

    B, N, F1 = x.shape
    F2 = node_3D_repr.shape[-1]
    Fout = weight.shape[-1]
    out_dtype = x.dtype

    if adj_dtype is not None:
        adj = adj.astype(adj_dtype)

    # ---- pad N to a sublane multiple (8), Fout to a lane multiple (128) ----
    N_pad = -(-N // 8) * 8
    Fout_pad = -(-Fout // 128) * 128
    if N_pad != N:
        x = jnp.pad(x, ((0, 0), (0, N_pad - N), (0, 0)))
        node_3D_repr = jnp.pad(node_3D_repr, ((0, 0), (0, N_pad - N), (0, 0)))
        adj = jnp.pad(adj, ((0, 0), (0, N_pad - N), (0, N_pad - N)))

    # split the weight so the concat never materializes; pad output columns
    w1 = weight[:F1]
    w2 = weight[F1:]
    if Fout_pad != Fout:
        w1 = jnp.pad(w1, ((0, 0), (0, Fout_pad - Fout)))
        w2 = jnp.pad(w2, ((0, 0), (0, Fout_pad - Fout)))
        bias = jnp.pad(bias, (0, Fout_pad - Fout))
    bias2d = bias.reshape(1, Fout_pad).astype(jnp.float32)

    # ---- VMEM budgeting (generation-aware) --------------------------------
    budget, vmem_limit = _vmem_budget_and_limit()
    w_bytes = jnp.dtype(w1.dtype).itemsize
    fixed = 2 * ((F1 + F2) * Fout_pad * w_bytes) + Fout_pad * 4   # weights+bias
    budget = max(budget - fixed, 1 << 20)

    G = _choose_group(
        B, N_pad, F1, F2, Fout_pad,
        jnp.dtype(x.dtype).itemsize,
        jnp.dtype(adj.dtype).itemsize,
        jnp.dtype(out_dtype).itemsize,
        budget,
    )
    grid = (B // G,)

    out = pl.pallas_call(
        _node_network_kernel,
        out_shape=jax.ShapeDtypeStruct((B, N_pad, Fout_pad), out_dtype),
        grid_spec=pltpu.PrefetchScalarGridSpec(
            num_scalar_prefetch=0,
            grid=grid,
            in_specs=[
                pl.BlockSpec((G, N_pad, F1), lambda b: (b, 0, 0)),
                pl.BlockSpec((G, N_pad, F2), lambda b: (b, 0, 0)),
                pl.BlockSpec((G, N_pad, N_pad), lambda b: (b, 0, 0)),
                pl.BlockSpec((F1, Fout_pad), lambda b: (0, 0)),
                pl.BlockSpec((F2, Fout_pad), lambda b: (0, 0)),
                pl.BlockSpec((1, Fout_pad), lambda b: (0, 0)),
            ],
            out_specs=pl.BlockSpec((G, N_pad, Fout_pad), lambda b: (b, 0, 0)),
        ),
        compiler_params=pltpu.CompilerParams(
            dimension_semantics=("parallel",),
            vmem_limit_bytes=int(vmem_limit),
        ),
    )(x, node_3D_repr, adj, w1, w2, bias2d)

    return out[:, :N, :Fout]


def _reference(x, adj, node_3D_repr, weight, bias):
    # pure-JAX reference mirroring the PyTorch forward (mask=None, add_loop=True)
    B, N, _ = adj.shape
    x_cat = jnp.concatenate([x, node_3D_repr], axis=-1)
    eye = jnp.eye(N, dtype=bool)
    adj = jnp.where(eye[None], jnp.asarray(1.0, adj.dtype), adj)
    out = jnp.matmul(x_cat, weight)
    deg_inv_sqrt = jnp.maximum(adj.sum(-1), 1.0) ** -0.5
    adj = deg_inv_sqrt[:, :, None] * adj * deg_inv_sqrt[:, None, :]
    out = jnp.matmul(adj, out)
    return out + bias


if __name__ == "__main__":
    key = jax.random.PRNGKey(0)
    k_x, k_r, k_a, k_w = jax.random.split(key, 4)

    # ---- case 1: aligned shapes, bf16 adjacency stream (0/1 -> exact) ------
    B, N = 2, 8
    F1, F2 = 16, 16
    in_channels = F1 + F2
    out_channels = 32

    x = jax.random.normal(k_x, (B, N, F1), dtype=jnp.float32)
    node_3D_repr = jax.random.normal(k_r, (B, N, F2), dtype=jnp.float32)
    adj = (jax.random.uniform(k_a, (B, N, N)) > 0.5).astype(jnp.float32)
    adj = jnp.maximum(adj, jnp.transpose(adj, (0, 2, 1)))  # symmetric 0/1 adjacency

    # deterministic glorot init (matches PyTorch glorot() bounds)
    stdv = math.sqrt(6.0 / (in_channels + out_channels))
    weight = jax.random.uniform(k_w, (in_channels, out_channels),
                                minval=-stdv, maxval=stdv, dtype=jnp.float32)
    bias = jnp.zeros((out_channels,), dtype=jnp.float32)

    out = node_network_dense_03(x, adj, node_3D_repr, weight, bias,
                                adj_dtype=jnp.bfloat16)
    out = jax.block_until_ready(out)
    ref = _reference(x, adj, node_3D_repr, weight, bias)
    assert out.shape == (B, N, out_channels)
    assert jnp.allclose(out, ref, atol=1e-4, rtol=1e-4), \
        float(jnp.max(jnp.abs(out - ref)))

    # ---- case 2: unaligned N / odd B (exercises padding + divisor logic) ---
    B2, N2 = 3, 7
    k_x2, k_r2, k_a2 = jax.random.split(jax.random.PRNGKey(1), 3)
    x2 = jax.random.normal(k_x2, (B2, N2, F1), dtype=jnp.float32)
    r2 = jax.random.normal(k_r2, (B2, N2, F2), dtype=jnp.float32)
    adj2 = (jax.random.uniform(k_a2, (B2, N2, N2)) > 0.5).astype(jnp.float32)
    adj2 = jnp.maximum(adj2, jnp.transpose(adj2, (0, 2, 1)))

    out2 = node_network_dense_03(x2, adj2, r2, weight, bias)   # native f32 adj
    out2 = jax.block_until_ready(out2)
    ref2 = _reference(x2, adj2, r2, weight, bias)
    assert out2.shape == (B2, N2, out_channels)
    assert jnp.allclose(out2, ref2, atol=1e-4, rtol=1e-4), \
        float(jnp.max(jnp.abs(out2 - ref2)))

    print("KERNEL_OK")
</pallas_src>

<mosaic_0001>
module attributes {stable_mosaic.version = 11 : i64} {
  func.func @_node_network_kernel(%arg0: i32, %arg1: memref<1x8x16xf32, #tpu.memory_space<vmem>>, %arg2: memref<1x8x16xf32, #tpu.memory_space<vmem>>, %arg3: memref<1x8x8xbf16, #tpu.memory_space<vmem>>, %arg4: memref<16x128xf32, #tpu.memory_space<vmem>>, %arg5: memref<16x128xf32, #tpu.memory_space<vmem>>, %arg6: memref<1x128xf32, #tpu.memory_space<vmem>>, %arg7: memref<1x8x128xf32, #tpu.memory_space<vmem>>) attributes {dimension_semantics = [#tpu.dimension_semantics<parallel>], iteration_bounds = array<i64: 2>, scalar_prefetch = 0 : i64, scratch_operands = 0 : i64, tpu.core_type = #tpu.core_type<tc>, window_params = [{transform_indices = @transform_0, window_bounds = array<i64: 1, 8, 16>}, {transform_indices = @transform_1, window_bounds = array<i64: 1, 8, 16>}, {transform_indices = @transform_2, window_bounds = array<i64: 1, 8, 8>}, {pipeline_mode = #tpu.pipeline_mode<synchronous>, transform_indices = @transform_3, window_bounds = array<i64: 16, 128>}, {pipeline_mode = #tpu.pipeline_mode<synchronous>, transform_indices = @transform_4, window_bounds = array<i64: 16, 128>}, {pipeline_mode = #tpu.pipeline_mode<synchronous>, transform_indices = @transform_5, window_bounds = array<i64: 1, 128>}, {transform_indices = @transform_6, window_bounds = array<i64: 1, 8, 128>}]} {
    %c0 = arith.constant 0 : index
    %c0_0 = arith.constant 0 : index
    %c0_1 = arith.constant 0 : index
    %0 = vector.load %arg1[%c0, %c0_0, %c0_1] : memref<1x8x16xf32, #tpu.memory_space<vmem>>, vector<1x8x16xf32>
    %1 = vector.shape_cast %0 : vector<1x8x16xf32> to vector<8x16xf32>
    %c0_2 = arith.constant 0 : index
    %c0_3 = arith.constant 0 : index
    %c0_4 = arith.constant 0 : index
    %2 = vector.load %arg2[%c0_2, %c0_3, %c0_4] : memref<1x8x16xf32, #tpu.memory_space<vmem>>, vector<1x8x16xf32>
    %3 = vector.shape_cast %2 : vector<1x8x16xf32> to vector<8x16xf32>
    %c0_5 = arith.constant 0 : index
    %c0_6 = arith.constant 0 : index
    %4 = vector.load %arg4[%c0_5, %c0_6] : memref<16x128xf32, #tpu.memory_space<vmem>>, vector<16x128xf32>
    %cst = arith.constant dense<0.000000e+00> : vector<8x128xf32>
    %5 = tpu.matmul %1, %4, %cst {dimension_numbers = #tpu.dot_dimension_numbers<[1], [0], [0], [1], [0, 0, 1, 1], [], []>} : vector<8x16xf32>, vector<16x128xf32>, vector<8x128xf32> -> vector<8x128xf32>
    %c0_7 = arith.constant 0 : index
    %c0_8 = arith.constant 0 : index
    %6 = vector.load %arg5[%c0_7, %c0_8] : memref<16x128xf32, #tpu.memory_space<vmem>>, vector<16x128xf32>
    %cst_9 = arith.constant dense<0.000000e+00> : vector<8x128xf32>
    %7 = tpu.matmul %3, %6, %cst_9 {dimension_numbers = #tpu.dot_dimension_numbers<[1], [0], [0], [1], [0, 0, 1, 1], [], []>} : vector<8x16xf32>, vector<16x128xf32>, vector<8x128xf32> -> vector<8x128xf32>
    %8 = arith.addf %5, %7 : vector<8x128xf32>
    %9 = vector.shape_cast %8 : vector<8x128xf32> to vector<1x8x128xf32>
    %c0_10 = arith.constant 0 : index
    %c0_11 = arith.constant 0 : index
    %c0_12 = arith.constant 0 : index
    %10 = vector.load %arg3[%c0_10, %c0_11, %c0_12] : memref<1x8x8xbf16, #tpu.memory_space<vmem>>, vector<1x8x8xbf16>
    %11 = arith.extf %10 : vector<1x8x8xbf16> to vector<1x8x8xf32>
    %12 = tpu.iota {dimensions = array<i32: 0>} : vector<8x8xi32>
    %13 = tpu.iota {dimensions = array<i32: 1>} : vector<8x8xi32>
    %14 = arith.cmpi eq, %12, %13 : vector<8x8xi32>
    %15 = arith.extui %14 : vector<8x8xi1> to vector<8x8xi32>
    %16 = arith.sitofp %15 : vector<8x8xi32> to vector<8x8xf32>
    %17 = vector.shape_cast %16 : vector<8x8xf32> to vector<1x8x8xf32>
    %18 = arith.mulf %11, %17 : vector<1x8x8xf32>
    %cst_13 = arith.constant dense<0.000000e+00> : vector<1x8xf32>
    %19 = vector.multi_reduction <add>, %18, %cst_13 [2] : vector<1x8x8xf32> to vector<1x8xf32>
    %20 = vector.shape_cast %19 : vector<1x8xf32> to vector<1x8x1xf32>
    %cst_14 = arith.constant 1.000000e+00 : f32
    %21 = vector.broadcast %cst_14 : f32 to vector<1x8x1xf32>
    %22 = arith.subf %21, %20 : vector<1x8x1xf32>
    %cst_15 = arith.constant dense<0.000000e+00> : vector<1x8xf32>
    %23 = vector.multi_reduction <add>, %11, %cst_15 [2] : vector<1x8x8xf32> to vector<1x8xf32>
    %24 = vector.shape_cast %23 : vector<1x8xf32> to vector<1x8x1xf32>
    %25 = arith.addf %24, %22 : vector<1x8x1xf32>
    %cst_16 = arith.constant 1.000000e+00 : f32
    %26 = vector.broadcast %cst_16 : f32 to vector<1x8x1xf32>
    %27 = arith.maximumf %25, %26 : vector<1x8x1xf32>
    %28 = math.rsqrt %27 : vector<1x8x1xf32>
    %29 = vector.broadcast %28 : vector<1x8x1xf32> to vector<1x8x128xf32>
    %30 = arith.mulf %29, %9 : vector<1x8x128xf32>
    "tpu.trace_start"() <{level = 10 : i32, message = "gnm,gmf->gnf"}> : () -> ()
    %cst_17 = arith.constant dense<0.000000e+00> : vector<1x8x128xf32>
    %31 = tpu.matmul %11, %30, %cst_17 {dimension_numbers = #tpu.dot_dimension_numbers<[2], [1], [1], [2], [0, 0, 0, 1, 1, 2], [0], [0]>} : vector<1x8x8xf32>, vector<1x8x128xf32>, vector<1x8x128xf32> -> vector<1x8x128xf32>
    "tpu.trace_stop"() : () -> ()
    %32 = vector.broadcast %22 : vector<1x8x1xf32> to vector<1x8x128xf32>
    %33 = arith.mulf %32, %30 : vector<1x8x128xf32>
    %34 = arith.addf %31, %33 : vector<1x8x128xf32>
    %35 = vector.broadcast %28 : vector<1x8x1xf32> to vector<1x8x128xf32>
    %36 = arith.mulf %35, %34 : vector<1x8x128xf32>
    %c0_18 = arith.constant 0 : index
    %c0_19 = arith.constant 0 : index
    %37 = vector.load %arg6[%c0_18, %c0_19] : memref<1x128xf32, #tpu.memory_space<vmem>>, vector<1x128xf32>
    %38 = vector.shape_cast %37 : vector<1x128xf32> to vector<1x1x128xf32>
    %39 = vector.broadcast %38 : vector<1x1x128xf32> to vector<1x8x128xf32>
    %40 = arith.addf %36, %39 : vector<1x8x128xf32>
    %c0_20 = arith.constant 0 : index
    %c0_21 = arith.constant 0 : index
    %c0_22 = arith.constant 0 : index
    %41 = vector.load %arg7[%c0_20, %c0_21, %c0_22] : memref<1x8x128xf32, #tpu.memory_space<vmem>>, vector<1x8x128xf32>
    tpu.vector_store %arg7[%c0_20, %c0_21, %c0_22], %40 {strides = array<i32>} : memref<1x8x128xf32, #tpu.memory_space<vmem>>, vector<1x8x128xf32>,
    return
  }
  func.func @transform_0(%arg0: i32) -> (i32, i32, i32) {
    %c0_i32 = arith.constant 0 : i32
    %c0_i32_0 = arith.constant 0 : i32
    %c0_i32_1 = arith.constant 0 : i32
    return %arg0, %c0_i32, %c0_i32_0 : i32, i32, i32
  }
  func.func @transform_1(%arg0: i32) -> (i32, i32, i32) {
    %c0_i32 = arith.constant 0 : i32
    %c0_i32_0 = arith.constant 0 : i32
    %c0_i32_1 = arith.constant 0 : i32
    return %arg0, %c0_i32, %c0_i32_0 : i32, i32, i32
  }
  func.func @transform_2(%arg0: i32) -> (i32, i32, i32) {
    %c0_i32 = arith.constant 0 : i32
    %c0_i32_0 = arith.constant 0 : i32
    %c0_i32_1 = arith.constant 0 : i32
    return %arg0, %c0_i32, %c0_i32_0 : i32, i32, i32
  }
  func.func @transform_3(%arg0: i32) -> (i32, i32) {
    %c0_i32 = arith.constant 0 : i32
    %c0_i32_0 = arith.constant 0 : i32
    %c0_i32_1 = arith.constant 0 : i32
    return %c0_i32, %c0_i32_0 : i32, i32
  }
  func.func @transform_4(%arg0: i32) -> (i32, i32) {
    %c0_i32 = arith.constant 0 : i32
    %c0_i32_0 = arith.constant 0 : i32
    %c0_i32_1 = arith.constant 0 : i32
    return %c0_i32, %c0_i32_0 : i32, i32
  }
  func.func @transform_5(%arg0: i32) -> (i32, i32) {
    %c0_i32 = arith.constant 0 : i32
    %c0_i32_0 = arith.constant 0 : i32
    %c0_i32_1 = arith.constant 0 : i32
    return %c0_i32, %c0_i32_0 : i32, i32
  }
  func.func @transform_6(%arg0: i32) -> (i32, i32, i32) {
    %c0_i32 = arith.constant 0 : i32
    %c0_i32_0 = arith.constant 0 : i32
    %c0_i32_1 = arith.constant 0 : i32
    return %arg0, %c0_i32, %c0_i32_0 : i32, i32, i32
  }
}

</mosaic_0001>

<llo_original>
// kernel: tpu_custom_call.1
$region0: #{tpu_custom_call.1}
  #allocation0 [shape = 'u32[]', space=smem, size = 0x4, offset = 0x4, fixed_abs, tag = 'smem constant byte address 0x4 - core index']
  #allocation1 [shape = 'u32[72,128]{1,0:T(1,128)}', space=vmem, size = 0x9000, scoped, tag = 'internal scratch']
  %s0 = inlined_call_operand.hbm [shape: f32[2,8,16], index: 0, kind: input, shape index: {}]
  %s1 = inlined_call_operand.hbm [shape: f32[2,8,16], index: 1, kind: input, shape index: {}]
  %s2 = inlined_call_operand.hbm [shape: bf16[2,8,8], index: 2, kind: input, shape index: {}]
  %s3 = inlined_call_operand.hbm [shape: f32[16,128], index: 3, kind: input, shape index: {}]
  %s4 = inlined_call_operand.hbm [shape: f32[16,128], index: 4, kind: input, shape index: {}]
  %s5 = inlined_call_operand.vmem [shape: f32[1,128], index: 5, kind: input, shape index: {}]
  %s6 = inlined_call_operand.hbm [shape: f32[2,8,128], index: 6, kind: output, shape index: {}]
  %s7 = sld [smem:[#allocation0]]
  $region77: #{tpu_custom_call.1} parent=0
    _
  %s9 = ssub.s32 1, %s7
  %s10 = scalar_select 0, %s9, %s7
  $region1: #{tpu_custom_call.1} parent=0
    #allocation2 [shape = 'u8[8192]{0}', space=vmem, size = 0x2000, scoped, tag = 'input window, operand 0']
    #allocation3 [shape = 's32[2]{0}', space=sflag, size = 0x8, scoped, tag = 'scoped memory for tpu_custom_call.1']
    #allocation4 [shape = 's32[2]{0}', space=sflag, size = 0x8, scoped, tag = 'scoped memory for tpu_custom_call.1']
    #allocation5 [shape = 'u8[8192]{0}', space=vmem, size = 0x2000, scoped, tag = 'input window, operand 1']
    #allocation6 [shape = 's32[2]{0}', space=sflag, size = 0x8, scoped, tag = 'scoped memory for tpu_custom_call.1']
    #allocation7 [shape = 'u8[4096]{0}', space=vmem, size = 0x1000, scoped, tag = 'input window, operand 2']
    #allocation8 [shape = 'u8[8192]{0}', space=vmem, size = 0x2000, scoped, tag = 'input window, operand 3, single buffered']
    #allocation9 [shape = 's32[1]{0}', space=sflag, size = 0x4, scoped, tag = 'scoped memory for tpu_custom_call.1']
    #allocation10 [shape = 'u8[8192]{0}', space=vmem, size = 0x2000, scoped, tag = 'input window, operand 4, single buffered']
    #allocation11 [shape = 'u8[8192]{0}', space=vmem, size = 0x2000, scoped, tag = 'output window, operand 0']
    %11 = vsyncpa [#allocation3], 0
    %s12 = scalar_lea.sflag [#allocation3], 1
    %13 = vsyncpa %s12, 0
    %14 = vsyncpa [#allocation6], 0
    %s15 = scalar_lea.sflag [#allocation6], 1
    %16 = vsyncpa %s15, 0
    %17 = vsyncpa [#allocation9], 0
    %18 = vsyncpa [#allocation4], 0
    %s19 = scalar_lea.sflag [#allocation4], 1
    %20 = vsyncpa %s19, 0
    loop: start=0, step=1, limit=4
    $region2: #{tpu_custom_call.1} parent=1 // loop_pre_header
      _
    $region3: #{tpu_custom_call.1} parent=1 // loop_header
      %s22 = sphi 0, %s26
      %p23 = scmp.ge.s32.totalorder %s22, 4
      %s32 = sphi 0, %s34
      %s35 = sphi 0, %s32
      %s36 = sphi 0, %s35
      %s52 = sphi 0, %s36
      %s58 = sphi 0, %s60
      %s61 = sphi 0, %s58
      %s62 = sphi 0, %s61
      %s78 = sphi 0, %s62
      %s84 = sphi 0, %s86
      %s87 = sphi 0, %s84
      %s88 = sphi 0, %s87
      %s104 = sphi 0, %s88
      %s108 = sphi 0, %s108
      %s110 = sphi 0, %s108
      %s111 = sphi 0, %s110
      %s125 = sphi 0, %s111
      %s129 = sphi 0, %s129
      %s131 = sphi 0, %s129
      %s132 = sphi 0, %s131
      %s146 = sphi 0, %s132
      %s150 = sphi 0, %s150
      %s152 = sphi 0, %s150
      %s153 = sphi 0, %s152
      %s167 = sphi 0, %s153
      %s173 = sphi 0, %s175
      %s176 = sphi 0, %s173
      %s177 = sphi 0, %s176
      %s193 = sphi 0, %s177
    $region4: #{tpu_custom_call.1} parent=1 // loop_header_branch
      %25 = sbr.rel (%p23) target = $region8
    $region5: #{tpu_custom_call.1} parent=1 // loop_body
      %s27 = ssub.s32 %s22, 1
      %s28 = ssub.s32 %s22, 2
      %s29 = sadd.s32 %s22, 1
      %s30 = ssub.s32 %s22, %s29
      %p31 = scmp.eq.s32.totalorder %s30, 0
      %s33 = sadd.s32 %s32, 1
      %s34 = scalar_select %p31, %s32, %s33
      %p37 = pneg %p31
      %p38 = scmp.eq.s32.totalorder %s22, 1
      %p39 = por %p37, %p38
      %p40 = scmp.ne.s32.totalorder %s32, %s35
      %p41 = scmp.eq.s32.totalorder %s22, 0
      %p42 = por %p40, %p41
      %p43 = scmp.ne.s32.totalorder %s32, %s35
      %p44 = scmp.eq.s32.totalorder %s27, 1
      %p45 = por %p43, %p44
      %p46 = scmp.ne.s32.totalorder %s35, %s36
      %p47 = scmp.eq.s32.totalorder %s27, 0
      %p48 = por %p46, %p47
      %p49 = scmp.ne.s32.totalorder %s35, %s36
      %p50 = scmp.eq.s32.totalorder %s28, 1
      %p51 = por %p49, %p50
      %p53 = scmp.ne.s32.totalorder %s36, %s52
      %p54 = scmp.eq.s32.totalorder %s28, 0
      %p55 = por %p53, %p54
      %s56 = ssub.s32 %s22, %s29
      %p57 = scmp.eq.s32.totalorder %s56, 0
      %s59 = sadd.s32 %s58, 1
      %s60 = scalar_select %p57, %s58, %s59
      %p63 = pneg %p57
      %p64 = scmp.eq.s32.totalorder %s22, 1
      %p65 = por %p63, %p64
      %p66 = scmp.ne.s32.totalorder %s58, %s61
      %p67 = scmp.eq.s32.totalorder %s22, 0
      %p68 = por %p66, %p67
      %p69 = scmp.ne.s32.totalorder %s58, %s61
      %p70 = scmp.eq.s32.totalorder %s27, 1
      %p71 = por %p69, %p70
      %p72 = scmp.ne.s32.totalorder %s61, %s62
      %p73 = scmp.eq.s32.totalorder %s27, 0
      %p74 = por %p72, %p73
      %p75 = scmp.ne.s32.totalorder %s61, %s62
      %p76 = scmp.eq.s32.totalorder %s28, 1
      %p77 = por %p75, %p76
      %p79 = scmp.ne.s32.totalorder %s62, %s78
      %p80 = scmp.eq.s32.totalorder %s28, 0
      %p81 = por %p79, %p80
      %s82 = ssub.s32 %s22, %s29
      %p83 = scmp.eq.s32.totalorder %s82, 0
      %s85 = sadd.s32 %s84, 1
      %s86 = scalar_select %p83, %s84, %s85
      %p89 = pneg %p83
      %p90 = scmp.eq.s32.totalorder %s22, 1
      %p91 = por %p89, %p90
      %p92 = scmp.ne.s32.totalorder %s84, %s87
      %p93 = scmp.eq.s32.totalorder %s22, 0
      %p94 = por %p92, %p93
      %p95 = scmp.ne.s32.totalorder %s84, %s87
      %p96 = scmp.eq.s32.totalorder %s27, 1
      %p97 = por %p95, %p96
      %p98 = scmp.ne.s32.totalorder %s87, %s88
      %p99 = scmp.eq.s32.totalorder %s27, 0
      %p100 = por %p98, %p99
      %p101 = scmp.ne.s32.totalorder %s87, %s88
      %p102 = scmp.eq.s32.totalorder %s28, 1
      %p103 = por %p101, %p102
      %p105 = scmp.ne.s32.totalorder %s88, %s104
      %p106 = scmp.eq.s32.totalorder %s28, 0
      %p107 = por %p105, %p106
      %s109 = sadd.s32 %s108, 1
      %p112 = scmp.eq.s32.totalorder %s22, 1
      %p113 = scmp.ne.s32.totalorder %s108, %s110
      %p114 = scmp.eq.s32.totalorder %s22, 0
      %p115 = por %p113, %p114
      %p116 = scmp.ne.s32.totalorder %s108, %s110
      %p117 = scmp.eq.s32.totalorder %s27, 1
      %p118 = por %p116, %p117
      %p119 = scmp.ne.s32.totalorder %s110, %s111
      %p120 = scmp.eq.s32.totalorder %s27, 0
      %p121 = por %p119, %p120
      %p122 = scmp.ne.s32.totalorder %s110, %s111
      %p123 = scmp.eq.s32.totalorder %s28, 1
      %p124 = por %p122, %p123
      %p126 = scmp.ne.s32.totalorder %s111, %s125
      %p127 = scmp.eq.s32.totalorder %s28, 0
      %p128 = por %p126, %p127
      %s130 = sadd.s32 %s129, 1
      %p133 = scmp.eq.s32.totalorder %s22, 1
      %p134 = scmp.ne.s32.totalorder %s129, %s131
      %p135 = scmp.eq.s32.totalorder %s22, 0
      %p136 = por %p134, %p135
      %p137 = scmp.ne.s32.totalorder %s129, %s131
      %p138 = scmp.eq.s32.totalorder %s27, 1
      %p139 = por %p137, %p138
      %p140 = scmp.ne.s32.totalorder %s131, %s132
      %p141 = scmp.eq.s32.totalorder %s27, 0
      %p142 = por %p140, %p141
      %p143 = scmp.ne.s32.totalorder %s131, %s132
      %p144 = scmp.eq.s32.totalorder %s28, 1
      %p145 = por %p143, %p144
      %p147 = scmp.ne.s32.totalorder %s132, %s146
      %p148 = scmp.eq.s32.totalorder %s28, 0
      %p149 = por %p147, %p148
      %s151 = sadd.s32 %s150, 1
      %p154 = scmp.eq.s32.totalorder %s22, 1
      %p155 = scmp.ne.s32.totalorder %s150, %s152
      %p156 = scmp.eq.s32.totalorder %s22, 0
      %p157 = por %p155, %p156
      %p158 = scmp.ne.s32.totalorder %s150, %s152
      %p159 = scmp.eq.s32.totalorder %s27, 1
      %p160 = por %p158, %p159
      %p161 = scmp.ne.s32.totalorder %s152, %s153
      %p162 = scmp.eq.s32.totalorder %s27, 0
      %p163 = por %p161, %p162
      %p164 = scmp.ne.s32.totalorder %s152, %s153
      %p165 = scmp.eq.s32.totalorder %s28, 1
      %p166 = por %p164, %p165
      %p168 = scmp.ne.s32.totalorder %s153, %s167
      %p169 = scmp.eq.s32.totalorder %s28, 0
      %p170 = por %p168, %p169
      %s171 = ssub.s32 %s22, %s29
      %p172 = scmp.eq.s32.totalorder %s171, 0
      %s174 = sadd.s32 %s173, 1
      %s175 = scalar_select %p172, %s173, %s174
      %p178 = pneg %p172
      %p179 = scmp.eq.s32.totalorder %s22, 1
      %p180 = por %p178, %p179
      %p181 = scmp.ne.s32.totalorder %s173, %s176
      %p182 = scmp.eq.s32.totalorder %s22, 0
      %p183 = por %p181, %p182
      %p184 = scmp.ne.s32.totalorder %s173, %s176
      %p185 = scmp.eq.s32.totalorder %s27, 1
      %p186 = por %p184, %p185
      %p187 = scmp.ne.s32.totalorder %s176, %s177
      %p188 = scmp.eq.s32.totalorder %s27, 0
      %p189 = por %p187, %p188
      %p190 = scmp.ne.s32.totalorder %s176, %s177
      %p191 = scmp.eq.s32.totalorder %s28, 1
      %p192 = por %p190, %p191
      %p194 = scmp.ne.s32.totalorder %s177, %s193
      %p195 = scmp.eq.s32.totalorder %s28, 0
      %p196 = por %p194, %p195
      %p197 = scmp.le.s32.totalorder 1, %s22
      %p198 = scmp.lt.s32.totalorder %s22, 3
      %p199 = pnand %p197, %p198
      %p200 = pneg %p199
      // Predicated region
      $region9: #{tpu_custom_call.1} parent=5 // pred_check
        _
      $region10: #{tpu_custom_call.1} parent=5 // pred_check_branch
        %202 = sbr.rel (%p199) target = $region12
      $region11: #{tpu_custom_call.1} parent=5 // pred_region
        %s203 = ssub.s32 %s22, 1
        // Predicated region
        $region13: #{tpu_custom_call.1} parent=11 // pred_check
          %p204 = pneg %p121
        $region14: #{tpu_custom_call.1} parent=11 // pred_check_branch
          %206 = sbr.rel (%p204) target = $region16
        $region15: #{tpu_custom_call.1} parent=11 // pred_region
          %208 = vsyncadd [#allocation9], 0
          %s209 = sshll.u32 %s3, 4
          %s210 = int_to_ptr.hbm [resolvable:$true] %s209
          %s211 = sshll.u32 [#allocation8], 4
          %s212 = int_to_ptr.vmem [resolvable:$true] %s211
          %217 = dma.hbm_to_vmem [thread:$0]  %s210, 256, %s212, [#allocation9], 128, 128, 8
        $region16: #{tpu_custom_call.1} parent=11 // pred_fallthru
          _
        // Predicated region
        $region17: #{tpu_custom_call.1} parent=11 // pred_check
          %p218 = pneg %p142
        $region18: #{tpu_custom_call.1} parent=11 // pred_check_branch
          %220 = sbr.rel (%p218) target = $region20
        $region19: #{tpu_custom_call.1} parent=11 // pred_region
          %222 = vsyncadd [#allocation9], 0
          %s223 = sshll.u32 %s4, 4
          %s224 = int_to_ptr.hbm [resolvable:$true] %s223
          %s225 = sshll.u32 [#allocation10], 4
          %s226 = int_to_ptr.vmem [resolvable:$true] %s225
          %231 = dma.hbm_to_vmem [thread:$0]  %s224, 256, %s226, [#allocation9], 128, 128, 8
        $region20: #{tpu_custom_call.1} parent=11 // pred_fallthru
          _
        // Predicated region
        $region21: #{tpu_custom_call.1} parent=11 // pred_check
          %p232 = pneg %p163
        $region22: #{tpu_custom_call.1} parent=11 // pred_check_branch
          %234 = sbr.rel (%p232) target = $region24
        $region23: #{tpu_custom_call.1} parent=11 // pred_region
          _
        $region24: #{tpu_custom_call.1} parent=11 // pred_fallthru
          _
      $region12: #{tpu_custom_call.1} parent=5 // pred_fallthru
        _
      %p235 = scmp.lt.s32.totalorder %s22, 2
      // Predicated region
      $region25: #{tpu_custom_call.1} parent=5 // pred_check
        %p236 = pneg %p235
      $region26: #{tpu_custom_call.1} parent=5 // pred_check_branch
        %238 = sbr.rel (%p236) target = $region28
      $region27: #{tpu_custom_call.1} parent=5 // pred_region
        // Predicated region
        $region29: #{tpu_custom_call.1} parent=27 // pred_check
          %p239 = pneg %p42
        $region30: #{tpu_custom_call.1} parent=27 // pred_check_branch
          %241 = sbr.rel (%p239) target = $region32
        $region31: #{tpu_custom_call.1} parent=27 // pred_region
          %s242 = sand.u32 %s32, 1
          %s243 = scalar_lea.sflag [#allocation3], %s242
          %s244 = sand.u32 %s32, 1
          %s245 = smul.addr %s244, 8
          %s246 = scalar_lea.vmem [#allocation2], %s245
          %248 = vsyncadd %s243, 0
          %s249 = smul.addr %s22, 8
          %s250 = scalar_lea.hbm %s0, %s249
          %s252 = sshll.u32 %s250, 4
          %s253 = int_to_ptr.hbm [resolvable:$true] %s252
          %s254 = sshll.u32 %s246, 4
          %s255 = int_to_ptr.vmem [resolvable:$true] %s254
          %257 = dma.hbm_to_vmem [thread:$0]  %s253, 128, %s255, %s243
        $region32: #{tpu_custom_call.1} parent=27 // pred_fallthru
          _
        // Predicated region
        $region33: #{tpu_custom_call.1} parent=27 // pred_check
          %p258 = pneg %p68
        $region34: #{tpu_custom_call.1} parent=27 // pred_check_branch
          %260 = sbr.rel (%p258) target = $region36
        $region35: #{tpu_custom_call.1} parent=27 // pred_region
          %s261 = sand.u32 %s22, 1
          %s262 = scalar_lea.sflag [#allocation6], %s261
          %s263 = sand.u32 %s58, 1
          %s264 = smul.addr %s263, 8
          %s265 = scalar_lea.vmem [#allocation5], %s264
          %267 = vsyncadd %s262, 0
          %s268 = smul.addr %s22, 8
          %s269 = scalar_lea.hbm %s1, %s268
          %s271 = sshll.u32 %s269, 4
          %s272 = int_to_ptr.hbm [resolvable:$true] %s271
          %s273 = sshll.u32 %s265, 4
          %s274 = int_to_ptr.vmem [resolvable:$true] %s273
          %276 = dma.hbm_to_vmem [thread:$0]  %s272, 128, %s274, %s262
        $region36: #{tpu_custom_call.1} parent=27 // pred_fallthru
          _
        // Predicated region
        $region37: #{tpu_custom_call.1} parent=27 // pred_check
          %p277 = pneg %p94
        $region38: #{tpu_custom_call.1} parent=27 // pred_check_branch
          %279 = sbr.rel (%p277) target = $region40
        $region39: #{tpu_custom_call.1} parent=27 // pred_region
          %s280 = sand.u32 %s22, 1
          %s281 = scalar_lea.sflag [#allocation6], %s280
          %s282 = sand.u32 %s84, 1
          %s283 = smul.addr %s282, 4
          %s284 = scalar_lea.vmem [#allocation7], %s283
          %286 = vsyncadd %s281, 0
          %s287 = smul.addr %s22, 4
          %s288 = scalar_lea.hbm %s2, %s287
          %s290 = sshll.u32 %s288, 4
          %s291 = int_to_ptr.hbm [resolvable:$true] %s290
          %s292 = sshll.u32 %s284, 4
          %s293 = int_to_ptr.vmem [resolvable:$true] %s292
          %295 = dma.hbm_to_vmem [thread:$0]  %s291, 64, %s293, %s281
        $region40: #{tpu_custom_call.1} parent=27 // pred_fallthru
          _
      $region28: #{tpu_custom_call.1} parent=5 // pred_fallthru
        _
      %p296 = scmp.le.s32.totalorder 1, %s22
      %p297 = scmp.lt.s32.totalorder %s22, 3
      %p298 = pnand %p296, %p297
      %p299 = pneg %p298
      // Predicated region
      $region41: #{tpu_custom_call.1} parent=5 // pred_check
        _
      $region42: #{tpu_custom_call.1} parent=5 // pred_check_branch
        %301 = sbr.rel (%p298) target = $region44
      $region43: #{tpu_custom_call.1} parent=5 // pred_region
        %s302 = ssub.s32 %s22, 1
        %s303 = sand.u32 %s35, 1
        %s304 = scalar_lea.sflag [#allocation3], %s303
        %s305 = sand.u32 %s35, 1
        %s306 = smul.addr %s305, 8
        %s307 = scalar_lea.vmem [#allocation2], %s306
        // Predicated region
        $region45: #{tpu_custom_call.1} parent=43 // pred_check
          %p308 = pneg %p48
        $region46: #{tpu_custom_call.1} parent=43 // pred_check_branch
          %310 = sbr.rel (%p308) target = $region48
        $region47: #{tpu_custom_call.1} parent=43 // pred_region
          %312 = dma.done %s304, 128
        $region48: #{tpu_custom_call.1} parent=43 // pred_fallthru
          _
        %s313 = sand.u32 %s27, 1
        %s314 = scalar_lea.sflag [#allocation6], %s313
        %s315 = sand.u32 %s61, 1
        %s316 = smul.addr %s315, 8
        %s317 = scalar_lea.vmem [#allocation5], %s316
        // Predicated region
        $region49: #{tpu_custom_call.1} parent=43 // pred_check
          %p318 = pneg %p74
        $region50: #{tpu_custom_call.1} parent=43 // pred_check_branch
          %320 = sbr.rel (%p318) target = $region52
        $region51: #{tpu_custom_call.1} parent=43 // pred_region
          %322 = dma.done %s314, 128
        $region52: #{tpu_custom_call.1} parent=43 // pred_fallthru
          _
        %s323 = sand.u32 %s27, 1
        %s324 = scalar_lea.sflag [#allocation6], %s323
        %s325 = sand.u32 %s87, 1
        %s326 = smul.addr %s325, 4
        %s327 = scalar_lea.vmem [#allocation7], %s326
        // Predicated region
        $region53: #{tpu_custom_call.1} parent=43 // pred_check
          %p328 = pneg %p100
        $region54: #{tpu_custom_call.1} parent=43 // pred_check_branch
          %330 = sbr.rel (%p328) target = $region56
        $region55: #{tpu_custom_call.1} parent=43 // pred_region
          %332 = dma.done %s324, 64
        $region56: #{tpu_custom_call.1} parent=43 // pred_fallthru
          _
        // Predicated region
        $region57: #{tpu_custom_call.1} parent=43 // pred_check
          %p333 = pneg %p121
        $region58: #{tpu_custom_call.1} parent=43 // pred_check_branch
          %335 = sbr.rel (%p333) target = $region60
        $region59: #{tpu_custom_call.1} parent=43 // pred_region
          %337 = dma.done [#allocation9], 256
        $region60: #{tpu_custom_call.1} parent=43 // pred_fallthru
          _
        // Predicated region
        $region61: #{tpu_custom_call.1} parent=43 // pred_check
          %p338 = pneg %p142
        $region62: #{tpu_custom_call.1} parent=43 // pred_check_branch
          %340 = sbr.rel (%p338) target = $region64
        $region63: #{tpu_custom_call.1} parent=43 // pred_region
          %342 = dma.done [#allocation9], 256
        $region64: #{tpu_custom_call.1} parent=43 // pred_fallthru
          _
        %s343 = sand.u32 %s35, 1
        %s344 = scalar_lea.sflag [#allocation3], %s343
        %s345 = sand.u32 %s35, 1
        %s346 = smul.addr %s345, 8
        %s347 = scalar_lea.vmem [#allocation2], %s346
        %p348 = pneg %p48
        %p349 = pneg %p45
        %s350 = sand.u32 %s27, 1
        %s351 = scalar_lea.sflag [#allocation6], %s350
        %s352 = sand.u32 %s61, 1
        %s353 = smul.addr %s352, 8
        %s354 = scalar_lea.vmem [#allocation5], %s353
        %p355 = pneg %p74
        %p356 = pneg %p71
        %s357 = sand.u32 %s27, 1
        %s358 = scalar_lea.sflag [#allocation6], %s357
        %s359 = sand.u32 %s87, 1
        %s360 = smul.addr %s359, 4
        %s361 = scalar_lea.vmem [#allocation7], %s360
        %p362 = pneg %p100
        %p363 = pneg %p97
        %p364 = pneg %p121
        %p365 = pneg %p118
        %p366 = pneg %p142
        %p367 = pneg %p139
        %p368 = pneg %p163
        %p369 = pneg %p160
        %p370 = pneg %p189
        %p371 = pneg %p186
        %s372 = sand.u32 %s176, 1
        %s373 = scalar_lea.sflag [#allocation4], %s372
        %s374 = sand.u32 %s176, 1
        %s375 = smul.addr %s374, 8
        %s376 = scalar_lea.vmem [#allocation11], %s375
        %v377 = vld [vmem:[%s307] sm:$0xff]
        %v378 = vld [vmem:[%s317] sm:$0xff]
        %v379 = vld [vmem:[#allocation8] sm:$0xff]
        %v380 = vld [vmem:[#allocation8 + $0x8] sm:$0xff]
        %v381 = vld [vmem:[#allocation10] sm:$0xff]
        %v382 = vld [vmem:[#allocation10 + $0x8] sm:$0xff]
        %vm383 = vcmask 130048
        %v385 = vsel %vm383, %v378, 0
        %387 = vmatpush.msra.mxu0 0.0
        %388 = vmatpush.msra.mxu0 0.0
        %389 = vmatpush.msra.mxu0 0.0
        %390 = vmatpush.msra.mxu0 0.0
        %391 = vmatpush.msra.mxu0 0.0
        %392 = vmatpush.msra.mxu0 0.0
        %393 = vmatpush.msra.mxu0 0.0
        %394 = vmatpush.msra.mxu0 0.0
        %395 = vmatpush.msra.mxu0 0.0
        %396 = vmatpush.msra.mxu0 0.0
        %397 = vmatpush.msra.mxu0 0.0
        %398 = vmatpush.msra.mxu0 0.0
        %399 = vmatpush.msra.mxu0 0.0
        %400 = vmatpush.msra.mxu0 0.0
        %401 = vmatpush.msra.mxu0 %v382
        %402 = vmatpush.msra.mxu0 %v381
        %403 = vmatmul.f32.gmra.mxu0 %v385
        %v404 = vpop.f32.mrf.mxu0
        %v405 = vadd.f32 0.0, %v404
        %406 = vdwg.mxu0
        %v408 = vsel %vm383, %v377, 0
        %410 = vmatpush.msra.mxu0 0.0
        %411 = vmatpush.msra.mxu0 0.0
        %412 = vmatpush.msra.mxu0 0.0
        %413 = vmatpush.msra.mxu0 0.0
        %414 = vmatpush.msra.mxu0 0.0
        %415 = vmatpush.msra.mxu0 0.0
        %416 = vmatpush.msra.mxu0 0.0
        %417 = vmatpush.msra.mxu0 0.0
        %418 = vmatpush.msra.mxu0 0.0
        %419 = vmatpush.msra.mxu0 0.0
        %420 = vmatpush.msra.mxu0 0.0
        %421 = vmatpush.msra.mxu0 0.0
        %422 = vmatpush.msra.mxu0 0.0
        %423 = vmatpush.msra.mxu0 0.0
        %424 = vmatpush.msra.mxu0 %v380
        %425 = vmatpush.msra.mxu0 %v379
        %426 = vmatmul.f32.gmra.mxu0 %v408
        %v427 = vpop.f32.mrf.mxu0
        %v428 = vadd.f32 %v405, %v427
        %429 = vdwg.mxu0
        %v430 = vld [vmem:[%s327] sm:$0xf]
        %v431 = vunpack.c.l.bf16 %v430
        %v432 = vlaneseq
        %v433 = vshrl.u32 %v432, 7
        %v434 = vlaneseq
        %v435 = vand.u32 %v434, 127
        %vm436 = vcmp.eq.s32.totalorder %v433, %v435
        %v437 = vsel %vm436, 1, 0
        %v438 = vcvt.s32.f32 %v437
        %v439 = vmul.f32 %v431, %v438
        %vm440 = vcmask 64512
        %v441 = vsel %vm440, %v439, 0.0
        %442 = vadd.xlane.f32.xlu0 %v441
        %v443 = vpop.xlane.xlu0 %442
        %v444 = vsub.f32 1.0, %v443
        %v445 = vsel %vm440, %v431, 0.0
        %446 = vadd.xlane.f32.xlu0 %v445
        %v447 = vpop.xlane.xlu0 %446
        %v448 = vadd.f32 %v447, %v444
        %v449 = vmax.f32 %v448, 1.0
        %v450 = vrsqrt.pop %v449
        %v451 = vmul.f32 %v450, %v449
        %v452 = vmul.f32 %v451, %v450
        %v453 = vmul.f32 0.5, %v452
        %v454 = vsub.f32 1.5, %v453
        %v455 = vmul.f32 %v450, %v454
        %vm456 = vweird.f32 %v449
        %vm457 = vweird.f32 %v450
        %vm458 = vmor %vm456, %vm457
        %v459 = vsel %vm458, %v450, %v455
        %v460 = vmul.f32 %v459, %v428
        %v461 = vmul.f32 %v444, %v460
        %v463 = vsel %vm440, %v431, 0
        %465 = vmatpush.msra.mxu0 0.0
        %466 = vmatpush.msra.mxu0 0.0
        %467 = vmatpush.msra.mxu0 0.0
        %468 = vmatpush.msra.mxu0 0.0
        %469 = vmatpush.msra.mxu0 0.0
        %470 = vmatpush.msra.mxu0 0.0
        %471 = vmatpush.msra.mxu0 0.0
        %472 = vmatpush.msra.mxu0 0.0
        %473 = vmatpush.msra.mxu0 0.0
        %474 = vmatpush.msra.mxu0 0.0
        %475 = vmatpush.msra.mxu0 0.0
        %476 = vmatpush.msra.mxu0 0.0
        %477 = vmatpush.msra.mxu0 0.0
        %478 = vmatpush.msra.mxu0 0.0
        %479 = vmatpush.msra.mxu0 0.0
        %480 = vmatpush.msra.mxu0 %v460
        %481 = vmatmul.f32.gmra.mxu0 %v463
        %v482 = vpop.f32.mrf.mxu0
        %v483 = vadd.f32 %v461, %v482
        %484 = vdwg.mxu0
        %v485 = vmul.f32 %v459, %v483
        %v486 = vld [vmem:[%s5] sm:$0x1]
        %v488 = vperm.slane %v486, 0
        %v490 = vadd.f32 %v485, %v488
        %491 = vst [vmem:[%s376] sm:$0xff] %v490
        %s492 = sand.u32 %s176, 1
        %s493 = scalar_lea.sflag [#allocation4], %s492
        %s494 = sand.u32 %s176, 1
        %s495 = smul.addr %s494, 8
        %s496 = scalar_lea.vmem [#allocation11], %s495
        // Predicated region
        $region65: #{tpu_custom_call.1} parent=43 // pred_check
          %p497 = pneg %p186
        $region66: #{tpu_custom_call.1} parent=43 // pred_check_branch
          %499 = sbr.rel (%p497) target = $region68
        $region67: #{tpu_custom_call.1} parent=43 // pred_region
          %501 = vsyncadd %s493, 0
          %s502 = smul.addr %s27, 8
          %s503 = scalar_lea.hbm %s6, %s502
          %s505 = sshll.u32 %s496, 4
          %s506 = int_to_ptr.vmem [resolvable:$true] %s505
          %s507 = sshll.u32 %s503, 4
          %s508 = int_to_ptr.hbm [resolvable:$true] %s507
          %510 = dma.vmem_to_hbm [thread:$0]  %s506, 128, %s508, %s493
        $region68: #{tpu_custom_call.1} parent=43 // pred_fallthru
          _
      $region44: #{tpu_custom_call.1} parent=5 // pred_fallthru
        _
      %p511 = scmp.le.s32.totalorder 2, %s22
      // Predicated region
      $region69: #{tpu_custom_call.1} parent=5 // pred_check
        %p512 = pneg %p511
      $region70: #{tpu_custom_call.1} parent=5 // pred_check_branch
        %514 = sbr.rel (%p512) target = $region72
      $region71: #{tpu_custom_call.1} parent=5 // pred_region
        %s515 = ssub.s32 %s22, 2
        // Predicated region
        $region73: #{tpu_custom_call.1} parent=71 // pred_check
          %p516 = pneg %p192
        $region74: #{tpu_custom_call.1} parent=71 // pred_check_branch
          %518 = sbr.rel (%p516) target = $region76
        $region75: #{tpu_custom_call.1} parent=71 // pred_region
          %s519 = sand.u32 %s177, 1
          %s520 = scalar_lea.sflag [#allocation4], %s519
          %s521 = sand.u32 %s177, 1
          %s522 = smul.addr %s521, 8
          %s523 = scalar_lea.vmem [#allocation11], %s522
          %525 = dma.done %s520, 128
        $region76: #{tpu_custom_call.1} parent=71 // pred_fallthru
          _
      $region72: #{tpu_custom_call.1} parent=5 // pred_fallthru
        _
    $region6: #{tpu_custom_call.1} parent=1 // loop_footer
      %s26 = sadd.s32 1, %s22
    $region7: #{tpu_custom_call.1} parent=1 // loop_footer_branch
      %21 = sbr.rel target = $region3
    $region8: #{tpu_custom_call.1} parent=1 // loop_exit
      _
    %526 = vsyncpa [#allocation3], 1
    %s527 = scalar_lea.sflag [#allocation3], 1
    %528 = vsyncpa %s527, 1
    %529 = vsyncpa [#allocation6], 1
    %s530 = scalar_lea.sflag [#allocation6], 1
    %531 = vsyncpa %s530, 1
    %532 = vsyncpa [#allocation9], 1
    %533 = vsyncpa [#allocation4], 1
    %s534 = scalar_lea.sflag [#allocation4], 1
    %535 = vsyncpa %s534, 1

</llo_original>
